<compile_context>
chip_gen: v5e
topology: v5e:2x2
jax: 0.10.0
libtpu: 0.0.40
codegen_flags: <defaults>
</compile_context>

<pallas_src>
import functools

import jax
import jax.numpy as jnp
from jax.experimental import pallas as pl
from jax.experimental.pallas import tpu as pltpu


def _conv1x1_kernel(x_ref, w_ref, b_ref, o_ref):
    # x_ref: (C_in, tl)   lane-dense spatial slab
    # w_ref: (C_out, C_in) grid-invariant weight (fetched once, VMEM-resident)
    # b_ref: (C_out, 1)    bias, broadcasts over lanes
    # o_ref: (C_out, tl)   lane-dense output slab
    acc = jnp.dot(w_ref[...], x_ref[...], preferred_element_type=jnp.float32)
    o_ref[...] = (acc + b_ref[...]).astype(o_ref.dtype)


@functools.partial(jax.jit, static_argnames=("tl",))
def last_conv(x, weight, bias, *, tl=2048):
    """1x1x1 Conv3d.

    x:      (N, C_in, D, H, W)   float32
    weight: (C_out, C_in)        float32 (Conv3d weight squeezed of 1x1x1 dims)
    bias:   (C_out,)             float32
    returns (N, C_out, D, H, W)  float32
    """
    N, C_in, D, H, W = x.shape
    C_out = weight.shape[0]
    S = D * H * W

    # Free reshapes only: no transpose, no pad (Pallas masks the partial
    # trailing spatial block; rows/voxels are independent so padded reads
    # never reach valid output).
    x3d = x.reshape(N, C_in, S)
    b2d = bias.reshape(C_out, 1)

    # Lane tile: a large multiple of 128, clamped to the rounded-up spatial
    # extent so we never allocate a block bigger than needed.
    s_pad = pl.cdiv(S, 128) * 128
    tl_eff = max(128, min(tl, s_pad))
    tl_eff = (tl_eff // 128) * 128
    n_s_tiles = pl.cdiv(S, tl_eff)

    # Accurate (mem-bound) cost hint for XLA's scheduler.
    flops = 2 * N * S * C_in * C_out
    bytes_accessed = 4 * (x3d.size + N * C_out * S + weight.size + bias.size)

    out3d = pl.pallas_call(
        _conv1x1_kernel,
        out_shape=jax.ShapeDtypeStruct((N, C_out, S), x.dtype),
        grid_spec=pltpu.PrefetchScalarGridSpec(
            num_scalar_prefetch=0,
            grid=(N, n_s_tiles),
            in_specs=[
                # batch dim squeezed; channels on sublanes, spatial on lanes
                pl.BlockSpec((None, C_in, tl_eff), lambda n, s: (n, 0, s)),
                # grid-invariant weight / bias: constant index_map => one DMA
                pl.BlockSpec((C_out, C_in), lambda n, s: (0, 0)),
                pl.BlockSpec((C_out, 1), lambda n, s: (0, 0)),
            ],
            out_specs=pl.BlockSpec((None, C_out, tl_eff), lambda n, s: (n, 0, s)),
        ),
        compiler_params=pltpu.CompilerParams(
            dimension_semantics=("parallel", "parallel")),
        cost_estimate=pl.CostEstimate(
            flops=flops, transcendentals=0, bytes_accessed=bytes_accessed),
    )(x3d, weight, b2d)

    return out3d.reshape(N, C_out, D, H, W)


if __name__ == "__main__":
    key = jax.random.PRNGKey(0)
    k_x, k_w, k_b = jax.random.split(key, 3)

    # small shapes consistent with a 3D-UNet last conv
    N, C_in, C_out = 2, 4, 3
    D = H = W = 16

    x = jax.random.normal(k_x, (N, C_in, D, H, W), dtype=jnp.float32)
    # deterministic parameter init (PyTorch-style uniform bound 1/sqrt(fan_in))
    bound = 1.0 / (C_in ** 0.5)
    weight = jax.random.uniform(k_w, (C_out, C_in), dtype=jnp.float32,
                                minval=-bound, maxval=bound)
    bias = jax.random.uniform(k_b, (C_out,), dtype=jnp.float32,
                              minval=-bound, maxval=bound)

    out = last_conv(x, weight, bias)
    jax.block_until_ready(out)

    # correctness check against plain-JAX reference
    ref = jnp.einsum("ncdhw,oc->nodhw", x, weight) + bias[None, :, None, None, None]
    assert out.shape == (N, C_out, D, H, W)
    assert jnp.allclose(out, ref, atol=1e-5, rtol=1e-5)

    print("KERNEL_OK")
</pallas_src>

<mosaic_0001>
module attributes {stable_mosaic.version = 11 : i64} {
  func.func @_conv1x1_kernel(%arg0: i32, %arg1: i32, %arg2: memref<1x4x2048xf32, #tpu.memory_space<vmem>>, %arg3: memref<3x4xf32, #tpu.memory_space<vmem>>, %arg4: memref<3x1xf32, #tpu.memory_space<vmem>>, %arg5: memref<1x3x2048xf32, #tpu.memory_space<vmem>>) attributes {dimension_semantics = [#tpu.dimension_semantics<parallel>, #tpu.dimension_semantics<parallel>], iteration_bounds = array<i64: 2, 2>, scalar_prefetch = 0 : i64, scratch_operands = 0 : i64, tpu.core_type = #tpu.core_type<tc>, window_params = [{transform_indices = @transform_0, window_bounds = array<i64: 1, 4, 2048>}, {pipeline_mode = #tpu.pipeline_mode<synchronous>, transform_indices = @transform_1, window_bounds = array<i64: 3, 4>}, {pipeline_mode = #tpu.pipeline_mode<synchronous>, transform_indices = @transform_2, window_bounds = array<i64: 3, 1>}, {transform_indices = @transform_3, window_bounds = array<i64: 1, 3, 2048>}]} {
    %c0 = arith.constant 0 : index
    %c0_0 = arith.constant 0 : index
    %0 = vector.load %arg3[%c0, %c0_0] : memref<3x4xf32, #tpu.memory_space<vmem>>, vector<3x4xf32>
    %c0_1 = arith.constant 0 : index
    %c0_2 = arith.constant 0 : index
    %c0_3 = arith.constant 0 : index
    %1 = vector.load %arg2[%c0_1, %c0_2, %c0_3] : memref<1x4x2048xf32, #tpu.memory_space<vmem>>, vector<1x4x2048xf32>
    %2 = vector.shape_cast %1 : vector<1x4x2048xf32> to vector<4x2048xf32>
    %cst = arith.constant dense<0.000000e+00> : vector<3x2048xf32>
    %3 = tpu.matmul %0, %2, %cst {dimension_numbers = #tpu.dot_dimension_numbers<[1], [0], [0], [1], [0, 0, 1, 1], [], []>} : vector<3x4xf32>, vector<4x2048xf32>, vector<3x2048xf32> -> vector<3x2048xf32>
    %c0_4 = arith.constant 0 : index
    %c0_5 = arith.constant 0 : index
    %4 = vector.load %arg4[%c0_4, %c0_5] : memref<3x1xf32, #tpu.memory_space<vmem>>, vector<3x1xf32>
    %5 = vector.broadcast %4 : vector<3x1xf32> to vector<3x2048xf32>
    %6 = arith.addf %3, %5 : vector<3x2048xf32>
    %c0_6 = arith.constant 0 : index
    %c0_7 = arith.constant 0 : index
    %c0_8 = arith.constant 0 : index
    %7 = vector.load %arg5[%c0_6, %c0_7, %c0_8] : memref<1x3x2048xf32, #tpu.memory_space<vmem>>, vector<1x3x2048xf32>
    %8 = vector.shape_cast %7 : vector<1x3x2048xf32> to vector<3x2048xf32>
    %9 = vector.shape_cast %6 : vector<3x2048xf32> to vector<1x3x2048xf32>
    tpu.vector_store %arg5[%c0_6, %c0_7, %c0_8], %9 {strides = array<i32>} : memref<1x3x2048xf32, #tpu.memory_space<vmem>>, vector<1x3x2048xf32>,
    return
  }
  func.func @transform_0(%arg0: i32, %arg1: i32) -> (i32, i32, i32) {
    %c0_i32 = arith.constant 0 : i32
    %c0_i32_0 = arith.constant 0 : i32
    return %arg0, %c0_i32, %arg1 : i32, i32, i32
  }
  func.func @transform_1(%arg0: i32, %arg1: i32) -> (i32, i32) {
    %c0_i32 = arith.constant 0 : i32
    %c0_i32_0 = arith.constant 0 : i32
    %c0_i32_1 = arith.constant 0 : i32
    return %c0_i32, %c0_i32_0 : i32, i32
  }
  func.func @transform_2(%arg0: i32, %arg1: i32) -> (i32, i32) {
    %c0_i32 = arith.constant 0 : i32
    %c0_i32_0 = arith.constant 0 : i32
    %c0_i32_1 = arith.constant 0 : i32
    return %c0_i32, %c0_i32_0 : i32, i32
  }
  func.func @transform_3(%arg0: i32, %arg1: i32) -> (i32, i32, i32) {
    %c0_i32 = arith.constant 0 : i32
    %c0_i32_0 = arith.constant 0 : i32
    return %arg0, %c0_i32, %arg1 : i32, i32, i32
  }
}

</mosaic_0001>

<llo_original>
// kernel: last_conv.1
$region0: #{last_conv.1}
  #allocation0 [shape = 'u32[]', space=smem, size = 0x4, offset = 0x4, fixed_abs, tag = 'smem constant byte address 0x4 - core index']
  #allocation1 [shape = 'u32[72,128]{1,0:T(1,128)}', space=vmem, size = 0x9000, scoped, tag = 'internal scratch']
  %s0 = inlined_call_operand.vmem [shape: f32[2,4,4096], index: 0, kind: input, shape index: {}]
  %s1 = inlined_call_operand.vmem [shape: f32[3,4], index: 1, kind: input, shape index: {}]
  %s2 = inlined_call_operand.vmem [shape: f32[3,1], index: 2, kind: input, shape index: {}]
  %s3 = inlined_call_operand.vmem [shape: f32[2,3,4096], index: 3, kind: output, shape index: {}]
  %s4 = sld [smem:[#allocation0]]
  $region45: #{last_conv.1} parent=0
    _
  %s6 = ssub.s32 1, %s4
  %s7 = scalar_select 0, %s6, %s4
  loop: start=0, step=1, limit=6
  $region2: #{last_conv.1} parent=0 // loop_pre_header
    _
  $region3: #{last_conv.1} parent=0 // loop_header
    %s9 = sphi 0, %s13
    %p10 = scmp.ge.s32.totalorder %s9, 6
    %s16 = sphi 0, %s28
    %s17 = sphi 0, %s24
    %s18 = sphi 0, %s16
    %s19 = sphi 0, %s17
    %s20 = sphi 0, %s18
    %s21 = sphi 0, %s19
    %s33 = sphi 0, %s35
    %s36 = sphi 0, %s33
    %s37 = sphi 0, %s36
    %s53 = sphi 0, %s37
    %s57 = sphi 0, %s57
    %s59 = sphi 0, %s57
    %s60 = sphi 0, %s59
    %s74 = sphi 0, %s60
    %s78 = sphi 0, %s78
    %s80 = sphi 0, %s78
    %s81 = sphi 0, %s80
    %s95 = sphi 0, %s81
    %s103 = sphi 0, %s105
    %s106 = sphi 0, %s103
    %s107 = sphi 0, %s106
    %s123 = sphi 0, %s107
  $region4: #{last_conv.1} parent=0 // loop_header_branch
    %12 = sbr.rel (%p10) target = $region8
  $region5: #{last_conv.1} parent=0 // loop_body
    %s14 = ssub.s32 %s9, 1
    %s15 = ssub.s32 %s9, 2
    %s22 = sadd.s32 1, %s17
    %p23 = scmp.ge.s32.totalorder %s22, 2
    %s24 = scalar_select %p23, 0, %s22
    %s25 = sadd.s32 1, %s16
    %s26 = scalar_select %p23, %s25, %s16
    %p27 = scmp.ge.s32.totalorder %s26, 2
    %s28 = scalar_select %p27, 0, %s26
    %s29 = ssub.s32 %s16, %s28
    %s30 = ssub.s32 %s17, %s24
    %s31 = sor.u32 %s29, %s30
    %p32 = scmp.eq.s32.totalorder %s31, 0
    %s34 = sadd.s32 %s33, 1
    %s35 = scalar_select %p32, %s33, %s34
    %p38 = pneg %p32
    %p39 = scmp.eq.s32.totalorder %s9, 3
    %p40 = por %p38, %p39
    %p41 = scmp.ne.s32.totalorder %s33, %s36
    %p42 = scmp.eq.s32.totalorder %s9, 0
    %p43 = por %p41, %p42
    %p44 = scmp.ne.s32.totalorder %s33, %s36
    %p45 = scmp.eq.s32.totalorder %s14, 3
    %p46 = por %p44, %p45
    %p47 = scmp.ne.s32.totalorder %s36, %s37
    %p48 = scmp.eq.s32.totalorder %s14, 0
    %p49 = por %p47, %p48
    %p50 = scmp.ne.s32.totalorder %s36, %s37
    %p51 = scmp.eq.s32.totalorder %s15, 3
    %p52 = por %p50, %p51
    %p54 = scmp.ne.s32.totalorder %s37, %s53
    %p55 = scmp.eq.s32.totalorder %s15, 0
    %p56 = por %p54, %p55
    %s58 = sadd.s32 %s57, 1
    %p61 = scmp.eq.s32.totalorder %s9, 3
    %p62 = scmp.ne.s32.totalorder %s57, %s59
    %p63 = scmp.eq.s32.totalorder %s9, 0
    %p64 = por %p62, %p63
    %p65 = scmp.ne.s32.totalorder %s57, %s59
    %p66 = scmp.eq.s32.totalorder %s14, 3
    %p67 = por %p65, %p66
    %p68 = scmp.ne.s32.totalorder %s59, %s60
    %p69 = scmp.eq.s32.totalorder %s14, 0
    %p70 = por %p68, %p69
    %p71 = scmp.ne.s32.totalorder %s59, %s60
    %p72 = scmp.eq.s32.totalorder %s15, 3
    %p73 = por %p71, %p72
    %p75 = scmp.ne.s32.totalorder %s60, %s74
    %p76 = scmp.eq.s32.totalorder %s15, 0
    %p77 = por %p75, %p76
    %s79 = sadd.s32 %s78, 1
    %p82 = scmp.eq.s32.totalorder %s9, 3
    %p83 = scmp.ne.s32.totalorder %s78, %s80
    %p84 = scmp.eq.s32.totalorder %s9, 0
    %p85 = por %p83, %p84
    %p86 = scmp.ne.s32.totalorder %s78, %s80
    %p87 = scmp.eq.s32.totalorder %s14, 3
    %p88 = por %p86, %p87
    %p89 = scmp.ne.s32.totalorder %s80, %s81
    %p90 = scmp.eq.s32.totalorder %s14, 0
    %p91 = por %p89, %p90
    %p92 = scmp.ne.s32.totalorder %s80, %s81
    %p93 = scmp.eq.s32.totalorder %s15, 3
    %p94 = por %p92, %p93
    %p96 = scmp.ne.s32.totalorder %s81, %s95
    %p97 = scmp.eq.s32.totalorder %s15, 0
    %p98 = por %p96, %p97
    %s99 = ssub.s32 %s16, %s28
    %s100 = ssub.s32 %s17, %s24
    %s101 = sor.u32 %s99, %s100
    %p102 = scmp.eq.s32.totalorder %s101, 0
    %s104 = sadd.s32 %s103, 1
    %s105 = scalar_select %p102, %s103, %s104
    %p108 = pneg %p102
    %p109 = scmp.eq.s32.totalorder %s9, 3
    %p110 = por %p108, %p109
    %p111 = scmp.ne.s32.totalorder %s103, %s106
    %p112 = scmp.eq.s32.totalorder %s9, 0
    %p113 = por %p111, %p112
    %p114 = scmp.ne.s32.totalorder %s103, %s106
    %p115 = scmp.eq.s32.totalorder %s14, 3
    %p116 = por %p114, %p115
    %p117 = scmp.ne.s32.totalorder %s106, %s107
    %p118 = scmp.eq.s32.totalorder %s14, 0
    %p119 = por %p117, %p118
    %p120 = scmp.ne.s32.totalorder %s106, %s107
    %p121 = scmp.eq.s32.totalorder %s15, 3
    %p122 = por %p120, %p121
    %p124 = scmp.ne.s32.totalorder %s107, %s123
    %p125 = scmp.eq.s32.totalorder %s15, 0
    %p126 = por %p124, %p125
    %p127 = scmp.le.s32.totalorder 1, %s9
    %p128 = scmp.lt.s32.totalorder %s9, 5
    %p129 = pnand %p127, %p128
    %p130 = pneg %p129
    // Predicated region
    $region9: #{last_conv.1} parent=5 // pred_check
      _
    $region10: #{last_conv.1} parent=5 // pred_check_branch
      %132 = sbr.rel (%p129) target = $region12
    $region11: #{last_conv.1} parent=5 // pred_region
      %s133 = ssub.s32 %s9, 1
      // Predicated region
      $region13: #{last_conv.1} parent=11 // pred_check
        %p134 = pneg %p70
      $region14: #{last_conv.1} parent=11 // pred_check_branch
        %136 = sbr.rel (%p134) target = $region16
      $region15: #{last_conv.1} parent=11 // pred_region
        _
      $region16: #{last_conv.1} parent=11 // pred_fallthru
        _
      // Predicated region
      $region17: #{last_conv.1} parent=11 // pred_check
        %p137 = pneg %p91
      $region18: #{last_conv.1} parent=11 // pred_check_branch
        %139 = sbr.rel (%p137) target = $region20
      $region19: #{last_conv.1} parent=11 // pred_region
        _
      $region20: #{last_conv.1} parent=11 // pred_fallthru
        _
    $region12: #{last_conv.1} parent=5 // pred_fallthru
      _
    %p140 = scmp.lt.s32.totalorder %s9, 4
    // Predicated region
    $region21: #{last_conv.1} parent=5 // pred_check
      %p141 = pneg %p140
    $region22: #{last_conv.1} parent=5 // pred_check_branch
      %143 = sbr.rel (%p141) target = $region24
    $region23: #{last_conv.1} parent=5 // pred_region
      // Predicated region
      $region25: #{last_conv.1} parent=23 // pred_check
        %p144 = pneg %p43
      $region26: #{last_conv.1} parent=23 // pred_check_branch
        %146 = sbr.rel (%p144) target = $region28
      $region27: #{last_conv.1} parent=23 // pred_region
        %s147 = smul.u32 16, %s17
        %p148 = scmp.lt.s32.totalorder %s16, 1
        %s149 = scalar_select %p148, %s16, 1
        %p150 = scmp.lt.s32.totalorder %s147, 31
        %s151 = scalar_select %p150, %s147, 31
        %s152 = smul.addr %s149, 32
        %s153 = sadd.s32 %s151, %s152
        %s154 = smul.addr %s153, 4
        %s155 = scalar_lea.vmem %s0, %s154
        %s156 = smul.u32 16, %s17
      $region28: #{last_conv.1} parent=23 // pred_fallthru
        _
    $region24: #{last_conv.1} parent=5 // pred_fallthru
      _
    %p157 = scmp.le.s32.totalorder 1, %s9
    %p158 = scmp.lt.s32.totalorder %s9, 5
    %p159 = pnand %p157, %p158
    %p160 = pneg %p159
    // Predicated region
    $region29: #{last_conv.1} parent=5 // pred_check
      _
    $region30: #{last_conv.1} parent=5 // pred_check_branch
      %162 = sbr.rel (%p159) target = $region32
    $region31: #{last_conv.1} parent=5 // pred_region
      %s163 = ssub.s32 %s9, 1
      %s164 = smul.u32 16, %s19
      %p165 = scmp.lt.s32.totalorder %s18, 1
      %s166 = scalar_select %p165, %s18, 1
      %p167 = scmp.lt.s32.totalorder %s164, 31
      %s168 = scalar_select %p167, %s164, 31
      %s169 = smul.addr %s166, 32
      %s170 = sadd.s32 %s168, %s169
      %s171 = smul.addr %s170, 4
      %s172 = scalar_lea.vmem %s0, %s171
      %p173 = pneg %p49
      %p174 = pneg %p46
      %p175 = pneg %p70
      %p176 = pneg %p67
      %p177 = pneg %p91
      %p178 = pneg %p88
      %p179 = pneg %p119
      %p180 = pneg %p116
      %s181 = smul.u32 16, %s19
      %p182 = scmp.lt.s32.totalorder %s18, 1
      %s183 = scalar_select %p182, %s18, 1
      %p184 = scmp.lt.s32.totalorder %s181, 31
      %s185 = scalar_select %p184, %s181, 31
      %s186 = smul.addr %s183, 32
      %s187 = sadd.s32 %s185, %s186
      %s188 = smul.addr %s187, 4
      %s189 = scalar_lea.vmem %s3, %s188
      %s190 = smul.u32 16, %s19
      %p191 = scmp.lt.s32.totalorder %s18, 1
      %s192 = scalar_select %p191, %s18, 1
      %p193 = scmp.lt.s32.totalorder %s190, 31
      %s194 = scalar_select %p193, %s190, 31
      %s195 = smul.addr %s192, 32
      %s196 = sadd.s32 %s194, %s195
      %s197 = smul.addr %s196, 4
      %s198 = scalar_lea.vmem %s0, %s197
      %s199 = smul.u32 16, %s19
      %s200 = smul.u32 16, %s19
      %p201 = scmp.lt.s32.totalorder %s18, 1
      %s202 = scalar_select %p201, %s18, 1
      %p203 = scmp.lt.s32.totalorder %s200, 31
      %s204 = scalar_select %p203, %s200, 31
      %s205 = smul.addr %s202, 32
      %s206 = sadd.s32 %s204, %s205
      %s207 = smul.addr %s206, 4
      %s208 = scalar_lea.vmem %s3, %s207
      %s209 = smul.u32 16, %s19
      %v210 = vld [vmem:[%s1] sm:$0x7]
      %v211 = vld [vmem:[%s198] sm:$0xff]
      %v212 = vld [vmem:[%s198 + $0x8] sm:$0xff]
      %v213 = vld [vmem:[%s198 + $0x10] sm:$0xff]
      %v214 = vld [vmem:[%s198 + $0x18] sm:$0xff]
      %v215 = vld [vmem:[%s198 + $0x20] sm:$0xff]
      %v216 = vld [vmem:[%s198 + $0x28] sm:$0xff]
      %v217 = vld [vmem:[%s198 + $0x30] sm:$0xff]
      %v218 = vld [vmem:[%s198 + $0x38] sm:$0xff]
      %v219 = vld [vmem:[%s2] sm:$0x7]
      %221 = vset.pattern.permute.xlu0 0
      %222 = vperm.xlu0 %221, %v219
      %v223 = vpop.permute.xlu0 %222
      %233 = vst [vmem:[#allocation1] ss:$2 sm:$0xff] %v211
      %s234 = scalar_lea.vmem [#allocation1], 16
      %235 = vst [vmem:[%s234] ss:$2 sm:$0xff] %v212
      %s236 = scalar_lea.vmem [#allocation1], 32
      %237 = vst [vmem:[%s236] ss:$2 sm:$0xff] %v213
      %s238 = scalar_lea.vmem [#allocation1], 48
      %239 = vst [vmem:[%s238] ss:$2 sm:$0xff] %v214
      %v240 = vld.sshfl [vmem:[#allocation1] sm:$0xff pattern:$0x75316420]
      %v241 = vld.sshfl [vmem:[#allocation1 + $0x8] sm:$0xff pattern:$0x75316420]
      %v242 = vld.sshfl [vmem:[#allocation1 + $0x10] sm:$0xff pattern:$0x75316420]
      %v243 = vld.sshfl [vmem:[#allocation1 + $0x18] sm:$0xff pattern:$0x75316420]
      %v244 = vld.sshfl [vmem:[#allocation1 + $0x20] sm:$0xff pattern:$0x75316420]
      %v245 = vld.sshfl [vmem:[#allocation1 + $0x28] sm:$0xff pattern:$0x75316420]
      %v246 = vld.sshfl [vmem:[#allocation1 + $0x30] sm:$0xff pattern:$0x75316420]
      %v247 = vld.sshfl [vmem:[#allocation1 + $0x38] sm:$0xff pattern:$0x75316420]
      %248 = vst [vmem:[#allocation1] ss:$2 sm:$0xff] %v215
      %249 = vst [vmem:[%s234] ss:$2 sm:$0xff] %v216
      %250 = vst [vmem:[%s236] ss:$2 sm:$0xff] %v217
      %251 = vst [vmem:[%s238] ss:$2 sm:$0xff] %v218
      %v252 = vld.sshfl [vmem:[#allocation1] sm:$0xff pattern:$0x75316420]
      %v253 = vld.sshfl [vmem:[#allocation1 + $0x8] sm:$0xff pattern:$0x75316420]
      %v254 = vld.sshfl [vmem:[#allocation1 + $0x10] sm:$0xff pattern:$0x75316420]
      %v255 = vld.sshfl [vmem:[#allocation1 + $0x18] sm:$0xff pattern:$0x75316420]
      %v256 = vld.sshfl [vmem:[#allocation1 + $0x20] sm:$0xff pattern:$0x75316420]
      %v257 = vld.sshfl [vmem:[#allocation1 + $0x28] sm:$0xff pattern:$0x75316420]
      %v258 = vld.sshfl [vmem:[#allocation1 + $0x30] sm:$0xff pattern:$0x75316420]
      %v259 = vld.sshfl [vmem:[#allocation1 + $0x38] sm:$0xff pattern:$0x75316420]
      %vm260 = vcmask 31744
      %v262 = vsel %vm260, %v210, 0
      %vm264 = vcmask 1043456
      %v265 = vsel %vm264, %v240, 0
      %v267 = vsel %vm264, %v241, 0
      %v269 = vsel %vm264, %v242, 0
      %v271 = vsel %vm264, %v243, 0
      %v273 = vsel %vm264, %v244, 0
      %v275 = vsel %vm264, %v245, 0
      %v277 = vsel %vm264, %v246, 0
      %v279 = vsel %vm264, %v247, 0
      %v281 = vsel %vm264, %v252, 0
      %v283 = vsel %vm264, %v253, 0
      %v285 = vsel %vm264, %v254, 0
      %v287 = vsel %vm264, %v255, 0
      %v289 = vsel %vm264, %v256, 0
      %v291 = vsel %vm264, %v257, 0
      %v293 = vsel %vm264, %v258, 0
      %v295 = vsel %vm264, %v259, 0
      %297 = vmatpush.msra.mxu0 0.0
      %298 = vmatpush.msra.mxu0 0.0
      %299 = vmatpush.msra.mxu0 0.0
      %300 = vmatpush.msra.mxu0 0.0
      %301 = vmatpush.msra.mxu0 0.0
      %302 = vmatpush.msra.mxu0 0.0
      %303 = vmatpush.msra.mxu0 0.0
      %304 = vmatpush.msra.mxu0 0.0
      %305 = vmatpush.msra.mxu0 0.0
      %306 = vmatpush.msra.mxu0 0.0
      %307 = vmatpush.msra.mxu0 0.0
      %308 = vmatpush.msra.mxu0 0.0
      %309 = vmatpush.msra.mxu0 0.0
      %310 = vmatpush.msra.mxu0 0.0
      %311 = vmatpush.msra.mxu0 0.0
      %312 = vmatpush.msra.mxu0 %v265
      %313 = vmatmul.f32.gmra.mxu0 %v262
      %v314 = vpop.f32.mrf.mxu0
      %v315 = vadd.f32 %v223, %v314
      %316 = vdwg.mxu0
      %317 = vmatpush.msra.mxu0 0.0
      %318 = vmatpush.msra.mxu0 0.0
      %319 = vmatpush.msra.mxu0 0.0
      %320 = vmatpush.msra.mxu0 0.0
      %321 = vmatpush.msra.mxu0 0.0
      %322 = vmatpush.msra.mxu0 0.0
      %323 = vmatpush.msra.mxu0 0.0
      %324 = vmatpush.msra.mxu0 0.0
      %325 = vmatpush.msra.mxu0 0.0
      %326 = vmatpush.msra.mxu0 0.0
      %327 = vmatpush.msra.mxu0 0.0
      %328 = vmatpush.msra.mxu0 0.0
      %329 = vmatpush.msra.mxu0 0.0
      %330 = vmatpush.msra.mxu0 0.0
      %331 = vmatpush.msra.mxu0 0.0
      %332 = vmatpush.msra.mxu0 %v267
      %333 = vmatmul.f32.gmra.mxu0 %v262
      %v334 = vpop.f32.mrf.mxu0
      %v335 = vadd.f32 %v223, %v334
      %336 = vdwg.mxu0
      %337 = vmatpush.msra.mxu0 0.0
      %338 = vmatpush.msra.mxu0 0.0
      %339 = vmatpush.msra.mxu0 0.0
      %340 = vmatpush.msra.mxu0 0.0
      %341 = vmatpush.msra.mxu0 0.0
      %342 = vmatpush.msra.mxu0 0.0
      %343 = vmatpush.msra.mxu0 0.0
      %344 = vmatpush.msra.mxu0 0.0
      %345 = vmatpush.msra.mxu0 0.0
      %346 = vmatpush.msra.mxu0 0.0
      %347 = vmatpush.msra.mxu0 0.0
      %348 = vmatpush.msra.mxu0 0.0
      %349 = vmatpush.msra.mxu0 0.0
      %350 = vmatpush.msra.mxu0 0.0
      %351 = vmatpush.msra.mxu0 0.0
      %352 = vmatpush.msra.mxu0 %v269
      %353 = vmatmul.f32.gmra.mxu0 %v262
      %v354 = vpop.f32.mrf.mxu0
      %v355 = vadd.f32 %v223, %v354
      %356 = vdwg.mxu0
      %357 = vmatpush.msra.mxu0 0.0
      %358 = vmatpush.msra.mxu0 0.0
      %359 = vmatpush.msra.mxu0 0.0
      %360 = vmatpush.msra.mxu0 0.0
      %361 = vmatpush.msra.mxu0 0.0
      %362 = vmatpush.msra.mxu0 0.0
      %363 = vmatpush.msra.mxu0 0.0
      %364 = vmatpush.msra.mxu0 0.0
      %365 = vmatpush.msra.mxu0 0.0
      %366 = vmatpush.msra.mxu0 0.0
      %367 = vmatpush.msra.mxu0 0.0
      %368 = vmatpush.msra.mxu0 0.0
      %369 = vmatpush.msra.mxu0 0.0
      %370 = vmatpush.msra.mxu0 0.0
      %371 = vmatpush.msra.mxu0 0.0
      %372 = vmatpush.msra.mxu0 %v271
      %373 = vmatmul.f32.gmra.mxu0 %v262
      %v374 = vpop.f32.mrf.mxu0
      %v375 = vadd.f32 %v223, %v374
      %376 = vdwg.mxu0
      %377 = vmatpush.msra.mxu0 0.0
      %378 = vmatpush.msra.mxu0 0.0
      %379 = vmatpush.msra.mxu0 0.0
      %380 = vmatpush.msra.mxu0 0.0
      %381 = vmatpush.msra.mxu0 0.0
      %382 = vmatpush.msra.mxu0 0.0
      %383 = vmatpush.msra.mxu0 0.0
      %384 = vmatpush.msra.mxu0 0.0
      %385 = vmatpush.msra.mxu0 0.0
      %386 = vmatpush.msra.mxu0 0.0
      %387 = vmatpush.msra.mxu0 0.0
      %388 = vmatpush.msra.mxu0 0.0
      %389 = vmatpush.msra.mxu0 0.0
      %390 = vmatpush.msra.mxu0 0.0
      %391 = vmatpush.msra.mxu0 0.0
      %392 = vmatpush.msra.mxu0 %v273
      %393 = vmatmul.f32.gmra.mxu0 %v262
      %v394 = vpop.f32.mrf.mxu0
      %v395 = vadd.f32 %v223, %v394
      %396 = vdwg.mxu0
      %397 = vmatpush.msra.mxu0 0.0
      %398 = vmatpush.msra.mxu0 0.0
      %399 = vmatpush.msra.mxu0 0.0
      %400 = vmatpush.msra.mxu0 0.0
      %401 = vmatpush.msra.mxu0 0.0
      %402 = vmatpush.msra.mxu0 0.0
      %403 = vmatpush.msra.mxu0 0.0
      %404 = vmatpush.msra.mxu0 0.0
      %405 = vmatpush.msra.mxu0 0.0
      %406 = vmatpush.msra.mxu0 0.0
      %407 = vmatpush.msra.mxu0 0.0
      %408 = vmatpush.msra.mxu0 0.0
      %409 = vmatpush.msra.mxu0 0.0
      %410 = vmatpush.msra.mxu0 0.0
      %411 = vmatpush.msra.mxu0 0.0
      %412 = vmatpush.msra.mxu0 %v275
      %413 = vmatmul.f32.gmra.mxu0 %v262
      %v414 = vpop.f32.mrf.mxu0
      %v415 = vadd.f32 %v223, %v414
      %416 = vdwg.mxu0
      %417 = vmatpush.msra.mxu0 0.0
      %418 = vmatpush.msra.mxu0 0.0
      %419 = vmatpush.msra.mxu0 0.0
      %420 = vmatpush.msra.mxu0 0.0
      %421 = vmatpush.msra.mxu0 0.0
      %422 = vmatpush.msra.mxu0 0.0
      %423 = vmatpush.msra.mxu0 0.0
      %424 = vmatpush.msra.mxu0 0.0
      %425 = vmatpush.msra.mxu0 0.0
      %426 = vmatpush.msra.mxu0 0.0
      %427 = vmatpush.msra.mxu0 0.0
      %428 = vmatpush.msra.mxu0 0.0
      %429 = vmatpush.msra.mxu0 0.0
      %430 = vmatpush.msra.mxu0 0.0
      %431 = vmatpush.msra.mxu0 0.0
      %432 = vmatpush.msra.mxu0 %v277
      %433 = vmatmul.f32.gmra.mxu0 %v262
      %v434 = vpop.f32.mrf.mxu0
      %v435 = vadd.f32 %v223, %v434
      %436 = vdwg.mxu0
      %437 = vmatpush.msra.mxu0 0.0
      %438 = vmatpush.msra.mxu0 0.0
      %439 = vmatpush.msra.mxu0 0.0
      %440 = vmatpush.msra.mxu0 0.0
      %441 = vmatpush.msra.mxu0 0.0
      %442 = vmatpush.msra.mxu0 0.0
      %443 = vmatpush.msra.mxu0 0.0
      %444 = vmatpush.msra.mxu0 0.0
      %445 = vmatpush.msra.mxu0 0.0
      %446 = vmatpush.msra.mxu0 0.0
      %447 = vmatpush.msra.mxu0 0.0
      %448 = vmatpush.msra.mxu0 0.0
      %449 = vmatpush.msra.mxu0 0.0
      %450 = vmatpush.msra.mxu0 0.0
      %451 = vmatpush.msra.mxu0 0.0
      %452 = vmatpush.msra.mxu0 %v279
      %453 = vmatmul.f32.gmra.mxu0 %v262
      %v454 = vpop.f32.mrf.mxu0
      %v455 = vadd.f32 %v223, %v454
      %456 = vdwg.mxu0
      %457 = vmatpush.msra.mxu0 0.0
      %458 = vmatpush.msra.mxu0 0.0
      %459 = vmatpush.msra.mxu0 0.0
      %460 = vmatpush.msra.mxu0 0.0
      %461 = vmatpush.msra.mxu0 0.0
      %462 = vmatpush.msra.mxu0 0.0
      %463 = vmatpush.msra.mxu0 0.0
      %464 = vmatpush.msra.mxu0 0.0
      %465 = vmatpush.msra.mxu0 0.0
      %466 = vmatpush.msra.mxu0 0.0
      %467 = vmatpush.msra.mxu0 0.0
      %468 = vmatpush.msra.mxu0 0.0
      %469 = vmatpush.msra.mxu0 0.0
      %470 = vmatpush.msra.mxu0 0.0
      %471 = vmatpush.msra.mxu0 0.0
      %472 = vmatpush.msra.mxu0 %v281
      %473 = vmatmul.f32.gmra.mxu0 %v262
      %v474 = vpop.f32.mrf.mxu0
      %v475 = vadd.f32 %v223, %v474
      %476 = vdwg.mxu0
      %477 = vmatpush.msra.mxu0 0.0
      %478 = vmatpush.msra.mxu0 0.0
      %479 = vmatpush.msra.mxu0 0.0
      %480 = vmatpush.msra.mxu0 0.0
      %481 = vmatpush.msra.mxu0 0.0
      %482 = vmatpush.msra.mxu0 0.0
      %483 = vmatpush.msra.mxu0 0.0
      %484 = vmatpush.msra.mxu0 0.0
      %485 = vmatpush.msra.mxu0 0.0
      %486 = vmatpush.msra.mxu0 0.0
      %487 = vmatpush.msra.mxu0 0.0
      %488 = vmatpush.msra.mxu0 0.0
      %489 = vmatpush.msra.mxu0 0.0
      %490 = vmatpush.msra.mxu0 0.0
      %491 = vmatpush.msra.mxu0 0.0
      %492 = vmatpush.msra.mxu0 %v283
      %493 = vmatmul.f32.gmra.mxu0 %v262
      %v494 = vpop.f32.mrf.mxu0
      %v495 = vadd.f32 %v223, %v494
      %496 = vdwg.mxu0
      %497 = vmatpush.msra.mxu0 0.0
      %498 = vmatpush.msra.mxu0 0.0
      %499 = vmatpush.msra.mxu0 0.0
      %500 = vmatpush.msra.mxu0 0.0
      %501 = vmatpush.msra.mxu0 0.0
      %502 = vmatpush.msra.mxu0 0.0
      %503 = vmatpush.msra.mxu0 0.0
      %504 = vmatpush.msra.mxu0 0.0
      %505 = vmatpush.msra.mxu0 0.0
      %506 = vmatpush.msra.mxu0 0.0
      %507 = vmatpush.msra.mxu0 0.0
      %508 = vmatpush.msra.mxu0 0.0
      %509 = vmatpush.msra.mxu0 0.0
      %510 = vmatpush.msra.mxu0 0.0
      %511 = vmatpush.msra.mxu0 0.0
      %512 = vmatpush.msra.mxu0 %v285
      %513 = vmatmul.f32.gmra.mxu0 %v262
      %v514 = vpop.f32.mrf.mxu0
      %v515 = vadd.f32 %v223, %v514
      %516 = vdwg.mxu0
      %517 = vmatpush.msra.mxu0 0.0
      %518 = vmatpush.msra.mxu0 0.0
      %519 = vmatpush.msra.mxu0 0.0
      %520 = vmatpush.msra.mxu0 0.0
      %521 = vmatpush.msra.mxu0 0.0
      %522 = vmatpush.msra.mxu0 0.0
      %523 = vmatpush.msra.mxu0 0.0
      %524 = vmatpush.msra.mxu0 0.0
      %525 = vmatpush.msra.mxu0 0.0
      %526 = vmatpush.msra.mxu0 0.0
      %527 = vmatpush.msra.mxu0 0.0
      %528 = vmatpush.msra.mxu0 0.0
      %529 = vmatpush.msra.mxu0 0.0
      %530 = vmatpush.msra.mxu0 0.0
      %531 = vmatpush.msra.mxu0 0.0
      %532 = vmatpush.msra.mxu0 %v287
      %533 = vmatmul.f32.gmra.mxu0 %v262
      %v534 = vpop.f32.mrf.mxu0
      %v535 = vadd.f32 %v223, %v534
      %536 = vdwg.mxu0
      %537 = vmatpush.msra.mxu0 0.0
      %538 = vmatpush.msra.mxu0 0.0
      %539 = vmatpush.msra.mxu0 0.0
      %540 = vmatpush.msra.mxu0 0.0
      %541 = vmatpush.msra.mxu0 0.0
      %542 = vmatpush.msra.mxu0 0.0
      %543 = vmatpush.msra.mxu0 0.0
      %544 = vmatpush.msra.mxu0 0.0
      %545 = vmatpush.msra.mxu0 0.0
      %546 = vmatpush.msra.mxu0 0.0
      %547 = vmatpush.msra.mxu0 0.0
      %548 = vmatpush.msra.mxu0 0.0
      %549 = vmatpush.msra.mxu0 0.0
      %550 = vmatpush.msra.mxu0 0.0
      %551 = vmatpush.msra.mxu0 0.0
      %552 = vmatpush.msra.mxu0 %v289
      %553 = vmatmul.f32.gmra.mxu0 %v262
      %v554 = vpop.f32.mrf.mxu0
      %v555 = vadd.f32 %v223, %v554
      %556 = vdwg.mxu0
      %557 = vmatpush.msra.mxu0 0.0
      %558 = vmatpush.msra.mxu0 0.0
      %559 = vmatpush.msra.mxu0 0.0
      %560 = vmatpush.msra.mxu0 0.0
      %561 = vmatpush.msra.mxu0 0.0
      %562 = vmatpush.msra.mxu0 0.0
      %563 = vmatpush.msra.mxu0 0.0
      %564 = vmatpush.msra.mxu0 0.0
      %565 = vmatpush.msra.mxu0 0.0
      %566 = vmatpush.msra.mxu0 0.0
      %567 = vmatpush.msra.mxu0 0.0
      %568 = vmatpush.msra.mxu0 0.0
      %569 = vmatpush.msra.mxu0 0.0
      %570 = vmatpush.msra.mxu0 0.0
      %571 = vmatpush.msra.mxu0 0.0
      %572 = vmatpush.msra.mxu0 %v291
      %573 = vmatmul.f32.gmra.mxu0 %v262
      %v574 = vpop.f32.mrf.mxu0
      %v575 = vadd.f32 %v223, %v574
      %576 = vdwg.mxu0
      %577 = vmatpush.msra.mxu0 0.0
      %578 = vmatpush.msra.mxu0 0.0
      %579 = vmatpush.msra.mxu0 0.0
      %580 = vmatpush.msra.mxu0 0.0
      %581 = vmatpush.msra.mxu0 0.0
      %582 = vmatpush.msra.mxu0 0.0
      %583 = vmatpush.msra.mxu0 0.0
      %584 = vmatpush.msra.mxu0 0.0
      %585 = vmatpush.msra.mxu0 0.0
      %586 = vmatpush.msra.mxu0 0.0
      %587 = vmatpush.msra.mxu0 0.0
      %588 = vmatpush.msra.mxu0 0.0
      %589 = vmatpush.msra.mxu0 0.0
      %590 = vmatpush.msra.mxu0 0.0
      %591 = vmatpush.msra.mxu0 0.0
      %592 = vmatpush.msra.mxu0 %v293
      %593 = vmatmul.f32.gmra.mxu0 %v262
      %v594 = vpop.f32.mrf.mxu0
      %v595 = vadd.f32 %v223, %v594
      %596 = vdwg.mxu0
      %597 = vmatpush.msra.mxu0 0.0
      %598 = vmatpush.msra.mxu0 0.0
      %599 = vmatpush.msra.mxu0 0.0
      %600 = vmatpush.msra.mxu0 0.0
      %601 = vmatpush.msra.mxu0 0.0
      %602 = vmatpush.msra.mxu0 0.0
      %603 = vmatpush.msra.mxu0 0.0
      %604 = vmatpush.msra.mxu0 0.0
      %605 = vmatpush.msra.mxu0 0.0
      %606 = vmatpush.msra.mxu0 0.0
      %607 = vmatpush.msra.mxu0 0.0
      %608 = vmatpush.msra.mxu0 0.0
      %609 = vmatpush.msra.mxu0 0.0
      %610 = vmatpush.msra.mxu0 0.0
      %611 = vmatpush.msra.mxu0 0.0
      %612 = vmatpush.msra.mxu0 %v295
      %613 = vmatmul.f32.gmra.mxu0 %v262
      %v614 = vpop.f32.mrf.mxu0
      %v615 = vadd.f32 %v223, %v614
      %616 = vdwg.mxu0
      %v633 = vrot.slane %v335, 4
      %v634 = vrot.slane %v375, 4
      %v635 = vrot.slane %v415, 4
      %v636 = vrot.slane %v455, 4
      %v637 = vrot.slane %v495, 4
      %v638 = vrot.slane %v535, 4
      %v639 = vrot.slane %v575, 4
      %v640 = vrot.slane %v615, 4
      %v641 = vsel %vm264, %v315, %v633
      %v642 = vsel %vm264, %v355, %v634
      %v643 = vsel %vm264, %v395, %v635
      %v644 = vsel %vm264, %v435, %v636
      %v645 = vsel %vm264, %v475, %v637
      %v646 = vsel %vm264, %v515, %v638
      %v647 = vsel %vm264, %v555, %v639
      %v648 = vsel %vm264, %v595, %v640
      %657 = vst [vmem:[%s208] sm:$0x77] %v641
      %658 = vst [vmem:[%s208 + $0x8] sm:$0x77] %v642
      %659 = vst [vmem:[%s208 + $0x10] sm:$0x77] %v643
      %660 = vst [vmem:[%s208 + $0x18] sm:$0x77] %v644
      %661 = vst [vmem:[%s208 + $0x20] sm:$0x77] %v645
      %662 = vst [vmem:[%s208 + $0x28] sm:$0x77] %v646
      %663 = vst [vmem:[%s208 + $0x30] sm:$0x77] %v647
      %664 = vst [vmem:[%s208 + $0x38] sm:$0x77] %v648
      %s665 = smul.u32 16, %s19
      %p666 = scmp.lt.s32.totalorder %s18, 1
      %s667 = scalar_select %p666, %s18, 1
      %p668 = scmp.lt.s32.totalorder %s665, 31
      %s669 = scalar_select %p668, %s665, 31
      %s670 = smul.addr %s667, 32
      %s671 = sadd.s32 %s669, %s670
      %s672 = smul.addr %s671, 4
      %s673 = scalar_lea.vmem %s3, %s672
      // Predicated region
      $region33: #{last_conv.1} parent=31 // pred_check
        %p674 = pneg %p116
      $region34: #{last_conv.1} parent=31 // pred_check_branch
        %676 = sbr.rel (%p674) target = $region36
      $region35: #{last_conv.1} parent=31 // pred_region
        %s677 = smul.u32 16, %s19
      $region36: #{last_conv.1} parent=31 // pred_fallthru
        _
    $region32: #{last_conv.1} parent=5 // pred_fallthru
      _
    %p678 = scmp.le.s32.totalorder 2, %s9
    // Predicated region
    $region37: #{last_conv.1} parent=5 // pred_check
      %p679 = pneg %p678
    $region38: #{last_conv.1} parent=5 // pred_check_branch
      %681 = sbr.rel (%p679) target = $region40
    $region39: #{last_conv.1} parent=5 // pred_region
      %s682 = ssub.s32 %s9, 2
      // Predicated region
      $region41: #{last_conv.1} parent=39 // pred_check
        %p683 = pneg %p122
      $region42: #{last_conv.1} parent=39 // pred_check_branch
        %685 = sbr.rel (%p683) target = $region44
      $region43: #{last_conv.1} parent=39 // pred_region
        %s686 = smul.u32 16, %s21
        %p687 = scmp.lt.s32.totalorder %s20, 1
        %s688 = scalar_select %p687, %s20, 1
        %p689 = scmp.lt.s32.totalorder %s686, 31
        %s690 = scalar_select %p689, %s686, 31
        %s691 = smul.addr %s688, 32
        %s692 = sadd.s32 %s690, %s691
        %s693 = smul.addr %s692, 4
        %s694 = scalar_lea.vmem %s3, %s693
      $region44: #{last_conv.1} parent=39 // pred_fallthru
        _
    $region40: #{last_conv.1} parent=5 // pred_fallthru
      _
  $region6: #{last_conv.1} parent=0 // loop_footer
    %s13 = sadd.s32 1, %s9
  $region7: #{last_conv.1} parent=0 // loop_footer_branch
    %8 = sbr.rel target = $region3
  $region8: #{last_conv.1} parent=0 // loop_exit
    _

</llo_original>
